<compile_context>
chip_gen: v5e
topology: v5e:2x2
jax: 0.10.0
libtpu: 0.0.40
codegen_flags: <defaults>
</compile_context>

<pallas_src>
import jax
import jax.numpy as jnp
from jax.experimental import pallas as pl
from jax.experimental.pallas import tpu as pltpu


H1, H2 = 400, 300          # PyTorch hidden sizes
H1P, H2P = 512, 384        # lane-aligned (multiple-of-128) padded sizes
TILE_B_MAX = 512           # batch rows per grid step (fits VMEM on v5e/v6e/v7x)


def _round_up(x, m):
    return ((x + m - 1) // m) * m


def critic_kernel(obs_ref, act_ref, w1a_ref, w1b_ref, b1_ref,
                  w2_ref, b2_ref, w3_ref, b3_ref, out_ref):
    # Layer 1: fused concat -> two accumulating MXU matmuls.
    h1 = jnp.dot(obs_ref[...], w1a_ref[...], preferred_element_type=jnp.float32)
    h1 = h1 + jnp.dot(act_ref[...], w1b_ref[...], preferred_element_type=jnp.float32)
    h1 = jnp.maximum(h1 + b1_ref[...], 0.0)                       # [TILE_B, H1P]

    # Layer 2: MXU matmul + bias + ReLU.
    h2 = jnp.dot(h1, w2_ref[...], preferred_element_type=jnp.float32)
    h2 = jnp.maximum(h2 + b2_ref[...], 0.0)                       # [TILE_B, H2P]

    # Q head: N=1 matmul wastes the MXU -> VPU multiply + lane reduce instead.
    q = jnp.sum(h2 * w3_ref[...], axis=-1, keepdims=True) + b3_ref[0, 0]

    # TODO(synk): output stays [TILE_B, 1] (lane-sparse store); a lane-dense
    # slab would need a sublane->lane relayout in-kernel and output bytes here
    # are negligible next to the matmuls.
    out_ref[...] = q.astype(out_ref.dtype)


def critic_forward(obs, action, params):
    """obs: [B, obs_dim], action: [B, act_dim] -> q: [B, 1] (float32)."""
    w1, b1, w2, b2, w3, b3 = params
    obs = obs.astype(jnp.float32)
    action = action.astype(jnp.float32)
    B, d_obs = obs.shape
    d_act = action.shape[1]

    # ---- prepare padded / split parameters (padding is zeros -> exact) -----
    w1p = jnp.pad(w1.astype(jnp.float32), ((0, 0), (0, H1P - H1)))
    w1a, w1b = w1p[:d_obs], w1p[d_obs:]
    b1p = jnp.pad(b1.astype(jnp.float32).reshape(1, H1), ((0, 0), (0, H1P - H1)))
    w2p = jnp.pad(w2.astype(jnp.float32), ((0, H1P - H1), (0, H2P - H2)))
    b2p = jnp.pad(b2.astype(jnp.float32).reshape(1, H2), ((0, 0), (0, H2P - H2)))
    w3p = jnp.pad(w3.astype(jnp.float32).reshape(1, H2), ((0, 0), (0, H2P - H2)))
    b3p = b3.astype(jnp.float32).reshape(1, 1)

    # ---- batch tiling -------------------------------------------------------
    tile_b = min(TILE_B_MAX, _round_up(B, 8))
    b_pad = _round_up(B, tile_b)
    if b_pad != B:
        obs = jnp.pad(obs, ((0, b_pad - B), (0, 0)))
        action = jnp.pad(action, ((0, b_pad - B), (0, 0)))
    grid = (b_pad // tile_b,)

    flops = 2 * b_pad * ((d_obs + d_act) * H1P + H1P * H2P + H2P)
    bytes_accessed = 4 * (
        b_pad * (d_obs + d_act + 1)
        + (d_obs + d_act) * H1P + H1P
        + H1P * H2P + H2P
        + H2P + 1
    )

    out = pl.pallas_call(
        critic_kernel,
        out_shape=jax.ShapeDtypeStruct((b_pad, 1), jnp.float32),
        grid=grid,
        in_specs=[
            pl.BlockSpec((tile_b, d_obs), lambda i: (i, 0)),      # obs tile
            pl.BlockSpec((tile_b, d_act), lambda i: (i, 0)),      # action tile
            pl.BlockSpec((d_obs, H1P), lambda i: (0, 0)),         # W1[:obs_dim]
            pl.BlockSpec((d_act, H1P), lambda i: (0, 0)),         # W1[obs_dim:]
            pl.BlockSpec((1, H1P), lambda i: (0, 0)),             # b1
            pl.BlockSpec((H1P, H2P), lambda i: (0, 0)),           # W2
            pl.BlockSpec((1, H2P), lambda i: (0, 0)),             # b2
            pl.BlockSpec((1, H2P), lambda i: (0, 0)),             # W3 as row
            pl.BlockSpec(memory_space=pltpu.MemorySpace.SMEM),    # b3 scalar
        ],
        out_specs=pl.BlockSpec((tile_b, 1), lambda i: (i, 0)),
        compiler_params=pltpu.CompilerParams(
            dimension_semantics=("parallel",),
            vmem_limit_bytes=32 * 1024 * 1024,
        ),
        cost_estimate=pl.CostEstimate(
            flops=flops, transcendentals=0, bytes_accessed=bytes_accessed),
    )(obs, action, w1a, w1b, b1p, w2p, b2p, w3p, b3p)

    return out[:B] if b_pad != B else out


def init_params(key, obs_dim, act_dim, h1=H1, h2=H2):
    """Deterministic synthetic parameters (PyTorch-Linear-like uniform init)."""
    d_in = obs_dim + act_dim
    ks = jax.random.split(key, 6)

    def lin(kw, kb, fan_in, fan_out):
        bound = 1.0 / jnp.sqrt(float(fan_in))
        w = jax.random.uniform(kw, (fan_in, fan_out), jnp.float32, -bound, bound)
        b = jax.random.uniform(kb, (fan_out,), jnp.float32, -bound, bound)
        return w, b

    w1, b1 = lin(ks[0], ks[1], d_in, h1)
    w2, b2 = lin(ks[2], ks[3], h1, h2)
    w3, b3 = lin(ks[4], ks[5], h2, 1)
    return (w1, b1, w2, b2, w3, b3)


def critic_ref(obs, action, params):
    """Plain-JAX reference for correctness checking."""
    w1, b1, w2, b2, w3, b3 = params
    x = jnp.concatenate([obs, action], axis=-1)
    x = jnp.maximum(x @ w1 + b1[None, :], 0.0)
    x = jnp.maximum(x @ w2 + b2[None, :], 0.0)
    return x @ w3 + b3[None, :]


if __name__ == "__main__":
    key = jax.random.PRNGKey(0)
    k_obs, k_act, k_param = jax.random.split(key, 3)

    batch, obs_dim, act_dim = 4, 24, 8
    obs = jax.random.normal(k_obs, (batch, obs_dim), jnp.float32)
    action = jax.random.normal(k_act, (batch, act_dim), jnp.float32)
    params = init_params(k_param, obs_dim, act_dim)

    q = critic_forward(obs, action, params)
    q = jax.block_until_ready(q)

    q_ref = critic_ref(obs, action, params)
    assert q.shape == (batch, 1)
    assert bool(jnp.all(jnp.isfinite(q)))
    assert jnp.allclose(q, q_ref, atol=1e-4, rtol=1e-4)
    print("KERNEL_OK")
</pallas_src>

<mosaic_0001>
module attributes {stable_mosaic.version = 11 : i64} {
  func.func @critic_kernel(%arg0: i32, %arg1: memref<8x24xf32, #tpu.memory_space<vmem>>, %arg2: memref<8x8xf32, #tpu.memory_space<vmem>>, %arg3: memref<24x512xf32, #tpu.memory_space<vmem>>, %arg4: memref<8x512xf32, #tpu.memory_space<vmem>>, %arg5: memref<1x512xf32, #tpu.memory_space<vmem>>, %arg6: memref<512x384xf32, #tpu.memory_space<vmem>>, %arg7: memref<1x384xf32, #tpu.memory_space<vmem>>, %arg8: memref<1x384xf32, #tpu.memory_space<vmem>>, %arg9: memref<1x1xf32, #tpu.memory_space<smem>>, %arg10: memref<8x1xf32, #tpu.memory_space<vmem>>) attributes {dimension_semantics = [#tpu.dimension_semantics<parallel>], iteration_bounds = array<i64: 1>, scalar_prefetch = 0 : i64, scratch_operands = 0 : i64, tpu.core_type = #tpu.core_type<tc>, window_params = [{transform_indices = @transform_0, window_bounds = array<i64: 8, 24>}, {transform_indices = @transform_1, window_bounds = array<i64: 8, 8>}, {pipeline_mode = #tpu.pipeline_mode<synchronous>, transform_indices = @transform_2, window_bounds = array<i64: 24, 512>}, {pipeline_mode = #tpu.pipeline_mode<synchronous>, transform_indices = @transform_3, window_bounds = array<i64: 8, 512>}, {pipeline_mode = #tpu.pipeline_mode<synchronous>, transform_indices = @transform_4, window_bounds = array<i64: 1, 512>}, {pipeline_mode = #tpu.pipeline_mode<synchronous>, transform_indices = @transform_5, window_bounds = array<i64: 512, 384>}, {pipeline_mode = #tpu.pipeline_mode<synchronous>, transform_indices = @transform_6, window_bounds = array<i64: 1, 384>}, {pipeline_mode = #tpu.pipeline_mode<synchronous>, transform_indices = @transform_7, window_bounds = array<i64: 1, 384>}, {transform_indices = @transform_8, window_bounds = array<i64: 1, 1>}, {transform_indices = @transform_9, window_bounds = array<i64: 8, 1>}]} {
    %c0 = arith.constant 0 : index
    %c0_0 = arith.constant 0 : index
    %0 = vector.load %arg1[%c0, %c0_0] : memref<8x24xf32, #tpu.memory_space<vmem>>, vector<8x24xf32>
    %c0_1 = arith.constant 0 : index
    %c0_2 = arith.constant 0 : index
    %1 = vector.load %arg3[%c0_1, %c0_2] : memref<24x512xf32, #tpu.memory_space<vmem>>, vector<24x512xf32>
    %cst = arith.constant dense<0.000000e+00> : vector<8x512xf32>
    %2 = tpu.matmul %0, %1, %cst {dimension_numbers = #tpu.dot_dimension_numbers<[1], [0], [0], [1], [0, 0, 1, 1], [], []>} : vector<8x24xf32>, vector<24x512xf32>, vector<8x512xf32> -> vector<8x512xf32>
    %c0_3 = arith.constant 0 : index
    %c0_4 = arith.constant 0 : index
    %3 = vector.load %arg2[%c0_3, %c0_4] : memref<8x8xf32, #tpu.memory_space<vmem>>, vector<8x8xf32>
    %c0_5 = arith.constant 0 : index
    %c0_6 = arith.constant 0 : index
    %4 = vector.load %arg4[%c0_5, %c0_6] : memref<8x512xf32, #tpu.memory_space<vmem>>, vector<8x512xf32>
    %cst_7 = arith.constant dense<0.000000e+00> : vector<8x512xf32>
    %5 = tpu.matmul %3, %4, %cst_7 {dimension_numbers = #tpu.dot_dimension_numbers<[1], [0], [0], [1], [0, 0, 1, 1], [], []>} : vector<8x8xf32>, vector<8x512xf32>, vector<8x512xf32> -> vector<8x512xf32>
    %6 = arith.addf %2, %5 : vector<8x512xf32>
    %c0_8 = arith.constant 0 : index
    %c0_9 = arith.constant 0 : index
    %7 = vector.load %arg5[%c0_8, %c0_9] : memref<1x512xf32, #tpu.memory_space<vmem>>, vector<1x512xf32>
    %8 = vector.broadcast %7 : vector<1x512xf32> to vector<8x512xf32>
    %9 = arith.addf %6, %8 : vector<8x512xf32>
    %cst_10 = arith.constant 0.000000e+00 : f32
    %10 = vector.broadcast %cst_10 : f32 to vector<8x512xf32>
    %11 = arith.maximumf %9, %10 : vector<8x512xf32>
    %c0_11 = arith.constant 0 : index
    %c0_12 = arith.constant 0 : index
    %12 = vector.load %arg6[%c0_11, %c0_12] : memref<512x384xf32, #tpu.memory_space<vmem>>, vector<512x384xf32>
    %cst_13 = arith.constant dense<0.000000e+00> : vector<8x384xf32>
    %13 = tpu.matmul %11, %12, %cst_13 {dimension_numbers = #tpu.dot_dimension_numbers<[1], [0], [0], [1], [0, 0, 1, 1], [], []>} : vector<8x512xf32>, vector<512x384xf32>, vector<8x384xf32> -> vector<8x384xf32>
    %c0_14 = arith.constant 0 : index
    %c0_15 = arith.constant 0 : index
    %14 = vector.load %arg7[%c0_14, %c0_15] : memref<1x384xf32, #tpu.memory_space<vmem>>, vector<1x384xf32>
    %15 = vector.broadcast %14 : vector<1x384xf32> to vector<8x384xf32>
    %16 = arith.addf %13, %15 : vector<8x384xf32>
    %cst_16 = arith.constant 0.000000e+00 : f32
    %17 = vector.broadcast %cst_16 : f32 to vector<8x384xf32>
    %18 = arith.maximumf %16, %17 : vector<8x384xf32>
    %c0_17 = arith.constant 0 : index
    %c0_18 = arith.constant 0 : index
    %19 = vector.load %arg8[%c0_17, %c0_18] : memref<1x384xf32, #tpu.memory_space<vmem>>, vector<1x384xf32>
    %20 = vector.broadcast %19 : vector<1x384xf32> to vector<8x384xf32>
    %21 = arith.mulf %18, %20 : vector<8x384xf32>
    %cst_19 = arith.constant dense<0.000000e+00> : vector<8xf32>
    %22 = vector.multi_reduction <add>, %21, %cst_19 [1] : vector<8x384xf32> to vector<8xf32>
    %23 = vector.shape_cast %22 : vector<8xf32> to vector<8x1xf32>
    %c0_20 = arith.constant 0 : index
    %c0_21 = arith.constant 0 : index
    %24 = memref.load %arg9[%c0_20, %c0_21] : memref<1x1xf32, #tpu.memory_space<smem>>
    %25 = vector.broadcast %24 : f32 to vector<8x1xf32>
    %26 = arith.addf %23, %25 : vector<8x1xf32>
    %c0_22 = arith.constant 0 : index
    %c0_23 = arith.constant 0 : index
    %27 = vector.load %arg10[%c0_22, %c0_23] : memref<8x1xf32, #tpu.memory_space<vmem>>, vector<8x1xf32>
    tpu.vector_store %arg10[%c0_22, %c0_23], %26 {strides = array<i32>} : memref<8x1xf32, #tpu.memory_space<vmem>>, vector<8x1xf32>,
    return
  }
  func.func @transform_0(%arg0: i32) -> (i32, i32) {
    %c0_i32 = arith.constant 0 : i32
    %c0_i32_0 = arith.constant 0 : i32
    return %arg0, %c0_i32 : i32, i32
  }
  func.func @transform_1(%arg0: i32) -> (i32, i32) {
    %c0_i32 = arith.constant 0 : i32
    %c0_i32_0 = arith.constant 0 : i32
    return %arg0, %c0_i32 : i32, i32
  }
  func.func @transform_2(%arg0: i32) -> (i32, i32) {
    %c0_i32 = arith.constant 0 : i32
    %c0_i32_0 = arith.constant 0 : i32
    %c0_i32_1 = arith.constant 0 : i32
    return %c0_i32, %c0_i32_0 : i32, i32
  }
  func.func @transform_3(%arg0: i32) -> (i32, i32) {
    %c0_i32 = arith.constant 0 : i32
    %c0_i32_0 = arith.constant 0 : i32
    %c0_i32_1 = arith.constant 0 : i32
    return %c0_i32, %c0_i32_0 : i32, i32
  }
  func.func @transform_4(%arg0: i32) -> (i32, i32) {
    %c0_i32 = arith.constant 0 : i32
    %c0_i32_0 = arith.constant 0 : i32
    %c0_i32_1 = arith.constant 0 : i32
    return %c0_i32, %c0_i32_0 : i32, i32
  }
  func.func @transform_5(%arg0: i32) -> (i32, i32) {
    %c0_i32 = arith.constant 0 : i32
    %c0_i32_0 = arith.constant 0 : i32
    %c0_i32_1 = arith.constant 0 : i32
    return %c0_i32, %c0_i32_0 : i32, i32
  }
  func.func @transform_6(%arg0: i32) -> (i32, i32) {
    %c0_i32 = arith.constant 0 : i32
    %c0_i32_0 = arith.constant 0 : i32
    %c0_i32_1 = arith.constant 0 : i32
    return %c0_i32, %c0_i32_0 : i32, i32
  }
  func.func @transform_7(%arg0: i32) -> (i32, i32) {
    %c0_i32 = arith.constant 0 : i32
    %c0_i32_0 = arith.constant 0 : i32
    %c0_i32_1 = arith.constant 0 : i32
    return %c0_i32, %c0_i32_0 : i32, i32
  }
  func.func @transform_8(%arg0: i32) -> (i32, i32) {
    %c0_i32 = arith.constant 0 : i32
    %c0_i32_0 = arith.constant 0 : i32
    %c0_i32_1 = arith.constant 0 : i32
    return %c0_i32, %c0_i32_0 : i32, i32
  }
  func.func @transform_9(%arg0: i32) -> (i32, i32) {
    %c0_i32 = arith.constant 0 : i32
    %c0_i32_0 = arith.constant 0 : i32
    return %arg0, %c0_i32 : i32, i32
  }
}

</mosaic_0001>

<llo_original>
// kernel: tpu_custom_call.1
$region0: #{tpu_custom_call.1}
  #allocation0 [shape = 'u32[]', space=smem, size = 0x4, offset = 0x4, fixed_abs, tag = 'smem constant byte address 0x4 - core index']
  #allocation1 [shape = 'u32[72,128]{1,0:T(1,128)}', space=vmem, size = 0x9000, scoped, tag = 'internal scratch']
  #allocation2 [shape = 'f32[1,1]{1,0:T(1,128)S(6)}', space=smem, size = 0x200, scoped, tag = 'scoped memory for tpu_custom_call.1']
  %s0 = inlined_call_operand.hbm [shape: f32[8,24], index: 0, kind: input, shape index: {}]
  %s1 = inlined_call_operand.hbm [shape: f32[8,8], index: 1, kind: input, shape index: {}]
  %s2 = inlined_call_operand.hbm [shape: f32[24,512], index: 2, kind: input, shape index: {}]
  %s3 = inlined_call_operand.hbm [shape: f32[8,512], index: 3, kind: input, shape index: {}]
  %s4 = inlined_call_operand.vmem [shape: f32[1,512], index: 4, kind: input, shape index: {}]
  %s5 = inlined_call_operand.hbm [shape: f32[512,384], index: 5, kind: input, shape index: {}]
  %s6 = inlined_call_operand.vmem [shape: f32[1,384], index: 6, kind: input, shape index: {}]
  %s7 = inlined_call_operand.hbm [shape: f32[1,384], index: 7, kind: input, shape index: {}]
  %s8 = inlined_call_operand.<no memory space> [shape: f32[1,1], index: 8, kind: input, shape index: {}]
  %s9 = inlined_call_operand.vmem [shape: f32[8,1], index: 9, kind: output, shape index: {}]
  %s10 = sld [smem:[#allocation0]]
  $region70: #{tpu_custom_call.1} parent=0
    _
  %s12 = ssub.s32 1, %s10
  %s13 = scalar_select 0, %s12, %s10
  %14 = sst [smem:[#allocation2]] %s8
  $region1: #{tpu_custom_call.1} parent=0
    #allocation3 [shape = 'u8[4096]{0}', space=vmem, size = 0x1000, scoped, tag = 'input window, operand 0, single buffered']
    #allocation4 [shape = 's32[1]{0}', space=sflag, size = 0x4, scoped, tag = 'scoped memory for tpu_custom_call.1']
    #allocation5 [shape = 'u8[4096]{0}', space=vmem, size = 0x1000, scoped, tag = 'input window, operand 1, single buffered']
    #allocation6 [shape = 's32[1]{0}', space=sflag, size = 0x4, scoped, tag = 'scoped memory for tpu_custom_call.1']
    #allocation7 [shape = 'u8[49152]{0}', space=vmem, size = 0xc000, scoped, tag = 'input window, operand 2, single buffered']
    #allocation8 [shape = 'u8[16384]{0}', space=vmem, size = 0x4000, scoped, tag = 'input window, operand 3, single buffered']
    #allocation9 [shape = 's32[1]{0}', space=sflag, size = 0x4, scoped, tag = 'scoped memory for tpu_custom_call.1']
    #allocation10 [shape = 'u8[786432]{0}', space=vmem, size = 0xc0000, scoped, tag = 'input window, operand 5, single buffered']
    #allocation11 [shape = 'u8[1536]{0}', space=vmem, size = 0x800, scoped, tag = 'input window, operand 7, single buffered']
    #allocation12 [shape = 's32[1]{0}', space=sflag, size = 0x4, scoped, tag = 'scoped memory for tpu_custom_call.1']
    %15 = vsyncpa [#allocation4], 0
    %16 = vsyncpa [#allocation6], 0
    %17 = vsyncpa [#allocation9], 0
    %18 = vsyncpa [#allocation12], 0
    // Predicated region
    $region2: #{tpu_custom_call.1} parent=1 // pred_check
      _
    $region3: #{tpu_custom_call.1} parent=1 // pred_check_branch
      %20 = sbr.rel (0) target = $region5
    $region4: #{tpu_custom_call.1} parent=1 // pred_region
      %22 = vsyncadd [#allocation4], 0
      %s24 = sshll.u32 %s0, 4
      %s25 = int_to_ptr.hbm [resolvable:$true] %s24
      %s26 = sshll.u32 [#allocation3], 4
      %s27 = int_to_ptr.vmem [resolvable:$true] %s26
      %29 = dma.hbm_to_vmem [thread:$0]  %s25, 128, %s27, [#allocation4]
    $region5: #{tpu_custom_call.1} parent=1 // pred_fallthru
      _
    // Predicated region
    $region6: #{tpu_custom_call.1} parent=1 // pred_check
      _
    $region7: #{tpu_custom_call.1} parent=1 // pred_check_branch
      %31 = sbr.rel (0) target = $region9
    $region8: #{tpu_custom_call.1} parent=1 // pred_region
      %33 = vsyncadd [#allocation6], 0
      %s35 = sshll.u32 %s1, 4
      %s36 = int_to_ptr.hbm [resolvable:$true] %s35
      %s37 = sshll.u32 [#allocation5], 4
      %s38 = int_to_ptr.vmem [resolvable:$true] %s37
      %40 = dma.hbm_to_vmem [thread:$0]  %s36, 128, %s38, [#allocation6]
    $region9: #{tpu_custom_call.1} parent=1 // pred_fallthru
      _
    // Predicated region
    $region10: #{tpu_custom_call.1} parent=1 // pred_check
      _
    $region11: #{tpu_custom_call.1} parent=1 // pred_check_branch
      %42 = sbr.rel (0) target = $region13
    $region12: #{tpu_custom_call.1} parent=1 // pred_region
      %44 = vsyncadd [#allocation6], 0
      %s45 = sshll.u32 %s2, 4
      %s46 = int_to_ptr.hbm [resolvable:$true] %s45
      %s47 = sshll.u32 [#allocation7], 4
      %s48 = int_to_ptr.vmem [resolvable:$true] %s47
      %53 = dma.hbm_to_vmem [thread:$0]  %s46, 1536, %s48, [#allocation6], 512, 512, 32
    $region13: #{tpu_custom_call.1} parent=1 // pred_fallthru
      _
    // Predicated region
    $region14: #{tpu_custom_call.1} parent=1 // pred_check
      _
    $region15: #{tpu_custom_call.1} parent=1 // pred_check_branch
      %55 = sbr.rel (0) target = $region17
    $region16: #{tpu_custom_call.1} parent=1 // pred_region
      %57 = vsyncadd [#allocation9], 0
      %s59 = sshll.u32 %s3, 4
      %s60 = int_to_ptr.hbm [resolvable:$true] %s59
      %s61 = sshll.u32 [#allocation8], 4
      %s62 = int_to_ptr.vmem [resolvable:$true] %s61
      %64 = dma.hbm_to_vmem [thread:$0]  %s60, 512, %s62, [#allocation9]
    $region17: #{tpu_custom_call.1} parent=1 // pred_fallthru
      _
    // Predicated region
    $region18: #{tpu_custom_call.1} parent=1 // pred_check
      _
    $region19: #{tpu_custom_call.1} parent=1 // pred_check_branch
      %66 = sbr.rel (0) target = $region21
    $region20: #{tpu_custom_call.1} parent=1 // pred_region
      _
    $region21: #{tpu_custom_call.1} parent=1 // pred_fallthru
      _
    // Predicated region
    $region22: #{tpu_custom_call.1} parent=1 // pred_check
      _
    $region23: #{tpu_custom_call.1} parent=1 // pred_check_branch
      %68 = sbr.rel (0) target = $region25
    $region24: #{tpu_custom_call.1} parent=1 // pred_region
      %70 = vsyncadd [#allocation9], 0
      %s71 = sshll.u32 %s5, 4
      %s72 = int_to_ptr.hbm [resolvable:$true] %s71
      %s73 = sshll.u32 [#allocation10], 4
      %s74 = int_to_ptr.vmem [resolvable:$true] %s73
      %79 = dma.hbm_to_vmem [thread:$0]  %s72, 24576, %s74, [#allocation9], 384, 384, 24
    $region25: #{tpu_custom_call.1} parent=1 // pred_fallthru
      _
    // Predicated region
    $region26: #{tpu_custom_call.1} parent=1 // pred_check
      _
    $region27: #{tpu_custom_call.1} parent=1 // pred_check_branch
      %81 = sbr.rel (0) target = $region29
    $region28: #{tpu_custom_call.1} parent=1 // pred_region
      _
    $region29: #{tpu_custom_call.1} parent=1 // pred_fallthru
      _
    // Predicated region
    $region30: #{tpu_custom_call.1} parent=1 // pred_check
      _
    $region31: #{tpu_custom_call.1} parent=1 // pred_check_branch
      %83 = sbr.rel (0) target = $region33
    $region32: #{tpu_custom_call.1} parent=1 // pred_region
      %85 = vsyncadd [#allocation12], 0
      %s87 = sshll.u32 %s7, 4
      %s88 = int_to_ptr.hbm [resolvable:$true] %s87
      %s89 = sshll.u32 [#allocation11], 4
      %s90 = int_to_ptr.vmem [resolvable:$true] %s89
      %92 = dma.hbm_to_vmem [thread:$0]  %s88, 48, %s90, [#allocation12]
    $region33: #{tpu_custom_call.1} parent=1 // pred_fallthru
      _
    // Predicated region
    $region34: #{tpu_custom_call.1} parent=1 // pred_check
      _
    $region35: #{tpu_custom_call.1} parent=1 // pred_check_branch
      %94 = sbr.rel (0) target = $region37
    $region36: #{tpu_custom_call.1} parent=1 // pred_region
      _
    $region37: #{tpu_custom_call.1} parent=1 // pred_fallthru
      _
    // Predicated region
    $region38: #{tpu_custom_call.1} parent=1 // pred_check
      _
    $region39: #{tpu_custom_call.1} parent=1 // pred_check_branch
      %96 = sbr.rel (0) target = $region41
    $region40: #{tpu_custom_call.1} parent=1 // pred_region
      %98 = dma.done [#allocation4], 128
    $region41: #{tpu_custom_call.1} parent=1 // pred_fallthru
      _
    // Predicated region
    $region42: #{tpu_custom_call.1} parent=1 // pred_check
      _
    $region43: #{tpu_custom_call.1} parent=1 // pred_check_branch
      %100 = sbr.rel (0) target = $region45
    $region44: #{tpu_custom_call.1} parent=1 // pred_region
      %102 = dma.done [#allocation6], 128
    $region45: #{tpu_custom_call.1} parent=1 // pred_fallthru
      _
    // Predicated region
    $region46: #{tpu_custom_call.1} parent=1 // pred_check
      _
    $region47: #{tpu_custom_call.1} parent=1 // pred_check_branch
      %104 = sbr.rel (0) target = $region49
    $region48: #{tpu_custom_call.1} parent=1 // pred_region
      %106 = dma.done [#allocation6], 1536
    $region49: #{tpu_custom_call.1} parent=1 // pred_fallthru
      _
    // Predicated region
    $region50: #{tpu_custom_call.1} parent=1 // pred_check
      _
    $region51: #{tpu_custom_call.1} parent=1 // pred_check_branch
      %108 = sbr.rel (0) target = $region53
    $region52: #{tpu_custom_call.1} parent=1 // pred_region
      %110 = dma.done [#allocation9], 512
    $region53: #{tpu_custom_call.1} parent=1 // pred_fallthru
      _
    // Predicated region
    $region54: #{tpu_custom_call.1} parent=1 // pred_check
      _
    $region55: #{tpu_custom_call.1} parent=1 // pred_check_branch
      %112 = sbr.rel (0) target = $region57
    $region56: #{tpu_custom_call.1} parent=1 // pred_region
      %114 = dma.done [#allocation9], 24576
    $region57: #{tpu_custom_call.1} parent=1 // pred_fallthru
      _
    // Predicated region
    $region58: #{tpu_custom_call.1} parent=1 // pred_check
      _
    $region59: #{tpu_custom_call.1} parent=1 // pred_check_branch
      %116 = sbr.rel (0) target = $region61
    $region60: #{tpu_custom_call.1} parent=1 // pred_region
      %118 = dma.done [#allocation12], 48
    $region61: #{tpu_custom_call.1} parent=1 // pred_fallthru
      _
    %v119 = vld [vmem:[#allocation3] sm:$0xff]
    %v120 = vld [vmem:[#allocation7] sm:$0xff]
    %v121 = vld [vmem:[#allocation7 + $0x8] sm:$0xff]
    %v122 = vld [vmem:[#allocation7 + $0x10] sm:$0xff]
    %v123 = vld [vmem:[#allocation7 + $0x18] sm:$0xff]
    %v124 = vld [vmem:[#allocation7 + $0x20] sm:$0xff]
    %v125 = vld [vmem:[#allocation7 + $0x28] sm:$0xff]
    %v126 = vld [vmem:[#allocation7 + $0x30] sm:$0xff]
    %v127 = vld [vmem:[#allocation7 + $0x38] sm:$0xff]
    %v128 = vld [vmem:[#allocation7 + $0x40] sm:$0xff]
    %v129 = vld [vmem:[#allocation7 + $0x48] sm:$0xff]
    %v130 = vld [vmem:[#allocation7 + $0x50] sm:$0xff]
    %v131 = vld [vmem:[#allocation7 + $0x58] sm:$0xff]
    %v132 = vld [vmem:[#allocation5] sm:$0xff]
    %v133 = vld [vmem:[#allocation8] sm:$0xff]
    %v134 = vld [vmem:[#allocation8 + $0x8] sm:$0xff]
    %v135 = vld [vmem:[#allocation8 + $0x10] sm:$0xff]
    %v136 = vld [vmem:[#allocation8 + $0x18] sm:$0xff]
    %vm137 = vcmask 64512
    %v139 = vsel %vm137, %v132, 0
    %141 = vmatpush.msra.mxu0 0.0
    %142 = vmatpush.msra.mxu0 0.0
    %143 = vmatpush.msra.mxu0 0.0
    %144 = vmatpush.msra.mxu0 0.0
    %145 = vmatpush.msra.mxu0 0.0
    %146 = vmatpush.msra.mxu0 0.0
    %147 = vmatpush.msra.mxu0 0.0
    %148 = vmatpush.msra.mxu0 0.0
    %149 = vmatpush.msra.mxu0 0.0
    %150 = vmatpush.msra.mxu0 0.0
    %151 = vmatpush.msra.mxu0 0.0
    %152 = vmatpush.msra.mxu0 0.0
    %153 = vmatpush.msra.mxu0 0.0
    %154 = vmatpush.msra.mxu0 0.0
    %155 = vmatpush.msra.mxu0 0.0
    %156 = vmatpush.msra.mxu0 %v133
    %157 = vmatmul.f32.gmra.mxu0 %v139
    %v158 = vpop.f32.mrf.mxu0
    %v159 = vadd.f32 0.0, %v158
    %160 = vdwg.mxu0
    %161 = vmatpush.msra.mxu0 0.0
    %162 = vmatpush.msra.mxu0 0.0
    %163 = vmatpush.msra.mxu0 0.0
    %164 = vmatpush.msra.mxu0 0.0
    %165 = vmatpush.msra.mxu0 0.0
    %166 = vmatpush.msra.mxu0 0.0
    %167 = vmatpush.msra.mxu0 0.0
    %168 = vmatpush.msra.mxu0 0.0
    %169 = vmatpush.msra.mxu0 0.0
    %170 = vmatpush.msra.mxu0 0.0
    %171 = vmatpush.msra.mxu0 0.0
    %172 = vmatpush.msra.mxu0 0.0
    %173 = vmatpush.msra.mxu0 0.0
    %174 = vmatpush.msra.mxu0 0.0
    %175 = vmatpush.msra.mxu0 0.0
    %176 = vmatpush.msra.mxu0 %v134
    %177 = vmatmul.f32.gmra.mxu0 %v139
    %v178 = vpop.f32.mrf.mxu0
    %v179 = vadd.f32 0.0, %v178
    %180 = vdwg.mxu0
    %181 = vmatpush.msra.mxu0 0.0
    %182 = vmatpush.msra.mxu0 0.0
    %183 = vmatpush.msra.mxu0 0.0
    %184 = vmatpush.msra.mxu0 0.0
    %185 = vmatpush.msra.mxu0 0.0
    %186 = vmatpush.msra.mxu0 0.0
    %187 = vmatpush.msra.mxu0 0.0
    %188 = vmatpush.msra.mxu0 0.0
    %189 = vmatpush.msra.mxu0 0.0
    %190 = vmatpush.msra.mxu0 0.0
    %191 = vmatpush.msra.mxu0 0.0
    %192 = vmatpush.msra.mxu0 0.0
    %193 = vmatpush.msra.mxu0 0.0
    %194 = vmatpush.msra.mxu0 0.0
    %195 = vmatpush.msra.mxu0 0.0
    %196 = vmatpush.msra.mxu0 %v135
    %197 = vmatmul.f32.gmra.mxu0 %v139
    %v198 = vpop.f32.mrf.mxu0
    %v199 = vadd.f32 0.0, %v198
    %200 = vdwg.mxu0
    %201 = vmatpush.msra.mxu0 0.0
    %202 = vmatpush.msra.mxu0 0.0
    %203 = vmatpush.msra.mxu0 0.0
    %204 = vmatpush.msra.mxu0 0.0
    %205 = vmatpush.msra.mxu0 0.0
    %206 = vmatpush.msra.mxu0 0.0
    %207 = vmatpush.msra.mxu0 0.0
    %208 = vmatpush.msra.mxu0 0.0
    %209 = vmatpush.msra.mxu0 0.0
    %210 = vmatpush.msra.mxu0 0.0
    %211 = vmatpush.msra.mxu0 0.0
    %212 = vmatpush.msra.mxu0 0.0
    %213 = vmatpush.msra.mxu0 0.0
    %214 = vmatpush.msra.mxu0 0.0
    %215 = vmatpush.msra.mxu0 0.0
    %216 = vmatpush.msra.mxu0 %v136
    %217 = vmatmul.f32.gmra.mxu0 %v139
    %v218 = vpop.f32.mrf.mxu0
    %v219 = vadd.f32 0.0, %v218
    %220 = vdwg.mxu0
    %vm221 = vcmask 195584
    %v223 = vsel %vm221, %v119, 0
    %225 = vmatpush.msra.mxu0 0.0
    %226 = vmatpush.msra.mxu0 0.0
    %227 = vmatpush.msra.mxu0 0.0
    %228 = vmatpush.msra.mxu0 0.0
    %229 = vmatpush.msra.mxu0 0.0
    %230 = vmatpush.msra.mxu0 0.0
    %231 = vmatpush.msra.mxu0 0.0
    %232 = vmatpush.msra.mxu0 0.0
    %233 = vmatpush.msra.mxu0 0.0
    %234 = vmatpush.msra.mxu0 0.0
    %235 = vmatpush.msra.mxu0 0.0
    %236 = vmatpush.msra.mxu0 0.0
    %237 = vmatpush.msra.mxu0 0.0
    %238 = vmatpush.msra.mxu0 %v128
    %239 = vmatpush.msra.mxu0 %v124
    %240 = vmatpush.msra.mxu0 %v120
    %241 = vmatmul.f32.gmra.mxu0 %v223
    %v242 = vpop.f32.mrf.mxu0
    %v243 = vadd.f32 %v159, %v242
    %244 = vdwg.mxu0
    %245 = vmatpush.msra.mxu0 0.0
    %246 = vmatpush.msra.mxu0 0.0
    %247 = vmatpush.msra.mxu0 0.0
    %248 = vmatpush.msra.mxu0 0.0
    %249 = vmatpush.msra.mxu0 0.0
    %250 = vmatpush.msra.mxu0 0.0
    %251 = vmatpush.msra.mxu0 0.0
    %252 = vmatpush.msra.mxu0 0.0
    %253 = vmatpush.msra.mxu0 0.0
    %254 = vmatpush.msra.mxu0 0.0
    %255 = vmatpush.msra.mxu0 0.0
    %256 = vmatpush.msra.mxu0 0.0
    %257 = vmatpush.msra.mxu0 0.0
    %258 = vmatpush.msra.mxu0 %v129
    %259 = vmatpush.msra.mxu0 %v125
    %260 = vmatpush.msra.mxu0 %v121
    %261 = vmatmul.f32.gmra.mxu0 %v223
    %v262 = vpop.f32.mrf.mxu0
    %v263 = vadd.f32 %v179, %v262
    %264 = vdwg.mxu0
    %265 = vmatpush.msra.mxu0 0.0
    %266 = vmatpush.msra.mxu0 0.0
    %267 = vmatpush.msra.mxu0 0.0
    %268 = vmatpush.msra.mxu0 0.0
    %269 = vmatpush.msra.mxu0 0.0
    %270 = vmatpush.msra.mxu0 0.0
    %271 = vmatpush.msra.mxu0 0.0
    %272 = vmatpush.msra.mxu0 0.0
    %273 = vmatpush.msra.mxu0 0.0
    %274 = vmatpush.msra.mxu0 0.0
    %275 = vmatpush.msra.mxu0 0.0
    %276 = vmatpush.msra.mxu0 0.0
    %277 = vmatpush.msra.mxu0 0.0
    %278 = vmatpush.msra.mxu0 %v130
    %279 = vmatpush.msra.mxu0 %v126
    %280 = vmatpush.msra.mxu0 %v122
    %281 = vmatmul.f32.gmra.mxu0 %v223
    %v282 = vpop.f32.mrf.mxu0
    %v283 = vadd.f32 %v199, %v282
    %284 = vdwg.mxu0
    %285 = vmatpush.msra.mxu0 0.0
    %286 = vmatpush.msra.mxu0 0.0
    %287 = vmatpush.msra.mxu0 0.0
    %288 = vmatpush.msra.mxu0 0.0
    %289 = vmatpush.msra.mxu0 0.0
    %290 = vmatpush.msra.mxu0 0.0
    %291 = vmatpush.msra.mxu0 0.0
    %292 = vmatpush.msra.mxu0 0.0
    %293 = vmatpush.msra.mxu0 0.0
    %294 = vmatpush.msra.mxu0 0.0
    %295 = vmatpush.msra.mxu0 0.0
    %296 = vmatpush.msra.mxu0 0.0
    %297 = vmatpush.msra.mxu0 0.0
    %298 = vmatpush.msra.mxu0 %v131
    %299 = vmatpush.msra.mxu0 %v127
    %300 = vmatpush.msra.mxu0 %v123
    %301 = vmatmul.f32.gmra.mxu0 %v223
    %v302 = vpop.f32.mrf.mxu0
    %v303 = vadd.f32 %v219, %v302
    %304 = vdwg.mxu0
    %v305 = vld [vmem:[%s4] sm:$0xf]
    %v307 = vperm.slane %v305, 0
    %v308 = vperm.slane %v305, 1
    %v309 = vperm.slane %v305, 2
    %v310 = vperm.slane %v305, 3
    %v315 = vadd.f32 %v243, %v307
    %v316 = vadd.f32 %v263, %v308
    %v317 = vadd.f32 %v283, %v309
    %v318 = vadd.f32 %v303, %v310
    %v319 = vmax.f32 %v315, 0.0
    %v320 = vmax.f32 %v316, 0.0
    %v321 = vmax.f32 %v317, 0.0
    %v322 = vmax.f32 %v318, 0.0
    %v323 = vld [vmem:[#allocation10] sm:$0xff]
    %v324 = vld [vmem:[#allocation10 + $0x8] sm:$0xff]
    %v325 = vld [vmem:[#allocation10 + $0x10] sm:$0xff]
    %v326 = vld [vmem:[#allocation10 + $0x18] sm:$0xff]
    %v327 = vld [vmem:[#allocation10 + $0x20] sm:$0xff]
    %v328 = vld [vmem:[#allocation10 + $0x28] sm:$0xff]
    %v329 = vld [vmem:[#allocation10 + $0x30] sm:$0xff]
    %v330 = vld [vmem:[#allocation10 + $0x38] sm:$0xff]
    %v331 = vld [vmem:[#allocation10 + $0x40] sm:$0xff]
    %v332 = vld [vmem:[#allocation10 + $0x48] sm:$0xff]
    %v333 = vld [vmem:[#allocation10 + $0x50] sm:$0xff]
    %v334 = vld [vmem:[#allocation10 + $0x58] sm:$0xff]
    %v335 = vld [vmem:[#allocation10 + $0x60] sm:$0xff]
    %v336 = vld [vmem:[#allocation10 + $0x68] sm:$0xff]
    %v337 = vld [vmem:[#allocation10 + $0x70] sm:$0xff]
    %v338 = vld [vmem:[#allocation10 + $0x78] sm:$0xff]
    %v339 = vld [vmem:[#allocation10 + $0x80] sm:$0xff]
    %v340 = vld [vmem:[#allocation10 + $0x88] sm:$0xff]
    %v341 = vld [vmem:[#allocation10 + $0x90] sm:$0xff]
    %v342 = vld [vmem:[#allocation10 + $0x98] sm:$0xff]
    %v343 = vld [vmem:[#allocation10 + $0xa0] sm:$0xff]
    %v344 = vld [vmem:[#allocation10 + $0xa8] sm:$0xff]
    %v345 = vld [vmem:[#allocation10 + $0xb0] sm:$0xff]
    %v346 = vld [vmem:[#allocation10 + $0xb8] sm:$0xff]
    %v347 = vld [vmem:[#allocation10 + $0xc0] sm:$0xff]
    %v348 = vld [vmem:[#allocation10 + $0xc8] sm:$0xff]
    %v349 = vld [vmem:[#allocation10 + $0xd0] sm:$0xff]
    %v350 = vld [vmem:[#allocation10 + $0xd8] sm:$0xff]
    %v351 = vld [vmem:[#allocation10 + $0xe0] sm:$0xff]
    %v352 = vld [vmem:[#allocation10 + $0xe8] sm:$0xff]
    %v353 = vld [vmem:[#allocation10 + $0xf0] sm:$0xff]
    %v354 = vld [vmem:[#allocation10 + $0xf8] sm:$0xff]
    %v355 = vld [vmem:[#allocation10 + $0x100] sm:$0xff]
    %v356 = vld [vmem:[#allocation10 + $0x108] sm:$0xff]
    %v357 = vld [vmem:[#allocation10 + $0x110] sm:$0xff]
    %v358 = vld [vmem:[#allocation10 + $0x118] sm:$0xff]
    %v359 = vld [vmem:[#allocation10 + $0x120] sm:$0xff]
    %v360 = vld [vmem:[#allocation10 + $0x128] sm:$0xff]
    %v361 = vld [vmem:[#allocation10 + $0x130] sm:$0xff]
    %v362 = vld [vmem:[#allocation10 + $0x138] sm:$0xff]
    %v363 = vld [vmem:[#allocation10 + $0x140] sm:$0xff]
    %v364 = vld [vmem:[#allocation10 + $0x148] sm:$0xff]
    %v365 = vld [vmem:[#allocation10 + $0x150] sm:$0xff]
    %v366 = vld [vmem:[#allocation10 + $0x158] sm:$0xff]
    %v367 = vld [vmem:[#allocation10 + $0x160] sm:$0xff]
    %v368 = vld [vmem:[#allocation10 + $0x168] sm:$0xff]
    %v369 = vld [vmem:[#allocation10 + $0x170] sm:$0xff]
    %v370 = vld [vmem:[#allocation10 + $0x178] sm:$0xff]
    %v371 = vld [vmem:[#allocation10 + $0x180] sm:$0xff]
    %v372 = vld [vmem:[#allocation10 + $0x188] sm:$0xff]
    %v373 = vld [vmem:[#allocation10 + $0x190] sm:$0xff]
    %v374 = vld [vmem:[#allocation10 + $0x198] sm:$0xff]
    %v375 = vld [vmem:[#allocation10 + $0x1a0] sm:$0xff]
    %v376 = vld [vmem:[#allocation10 + $0x1a8] sm:$0xff]
    %v377 = vld [vmem:[#allocation10 + $0x1b0] sm:$0xff]
    %v378 = vld [vmem:[#allocation10 + $0x1b8] sm:$0xff]
    %v379 = vld [vmem:[#allocation10 + $0x1c0] sm:$0xff]
    %v380 = vld [vmem:[#allocation10 + $0x1c8] sm:$0xff]
    %v381 = vld [vmem:[#allocation10 + $0x1d0] sm:$0xff]
    %v382 = vld [vmem:[#allocation10 + $0x1d8] sm:$0xff]
    %v383 = vld [vmem:[#allocation10 + $0x1e0] sm:$0xff]
    %v384 = vld [vmem:[#allocation10 + $0x1e8] sm:$0xff]
    %v385 = vld [vmem:[#allocation10 + $0x1f0] sm:$0xff]
    %v386 = vld [vmem:[#allocation10 + $0x1f8] sm:$0xff]
    %v387 = vld [vmem:[#allocation10 + $0x200] sm:$0xff]
    %v388 = vld [vmem:[#allocation10 + $0x208] sm:$0xff]
    %v389 = vld [vmem:[#allocation10 + $0x210] sm:$0xff]
    %v390 = vld [vmem:[#allocation10 + $0x218] sm:$0xff]
    %v391 = vld [vmem:[#allocation10 + $0x220] sm:$0xff]
    %v392 = vld [vmem:[#allocation10 + $0x228] sm:$0xff]
    %v393 = vld [vmem:[#allocation10 + $0x230] sm:$0xff]
    %v394 = vld [vmem:[#allocation10 + $0x238] sm:$0xff]
    %v395 = vld [vmem:[#allocation10 + $0x240] sm:$0xff]
    %v396 = vld [vmem:[#allocation10 + $0x248] sm:$0xff]
    %v397 = vld [vmem:[#allocation10 + $0x250] sm:$0xff]
    %v398 = vld [vmem:[#allocation10 + $0x258] sm:$0xff]
    %v399 = vld [vmem:[#allocation10 + $0x260] sm:$0xff]
    %v400 = vld [vmem:[#allocation10 + $0x268] sm:$0xff]
    %v401 = vld [vmem:[#allocation10 + $0x270] sm:$0xff]
    %v402 = vld [vmem:[#allocation10 + $0x278] sm:$0xff]
    %v403 = vld [vmem:[#allocation10 + $0x280] sm:$0xff]
    %v404 = vld [vmem:[#allocation10 + $0x288] sm:$0xff]
    %v405 = vld [vmem:[#allocation10 + $0x290] sm:$0xff]
    %v406 = vld [vmem:[#allocation10 + $0x298] sm:$0xff]
    %v407 = vld [vmem:[#allocation10 + $0x2a0] sm:$0xff]
    %v408 = vld [vmem:[#allocation10 + $0x2a8] sm:$0xff]
    %v409 = vld [vmem:[#allocation10 + $0x2b0] sm:$0xff]
    %v410 = vld [vmem:[#allocation10 + $0x2b8] sm:$0xff]
    %v411 = vld [vmem:[#allocation10 + $0x2c0] sm:$0xff]
    %v412 = vld [vmem:[#allocation10 + $0x2c8] sm:$0xff]
    %v413 = vld [vmem:[#allocation10 + $0x2d0] sm:$0xff]
    %v414 = vld [vmem:[#allocation10 + $0x2d8] sm:$0xff]
    %v415 = vld [vmem:[#allocation10 + $0x2e0] sm:$0xff]
    %v416 = vld [vmem:[#allocation10 + $0x2e8] sm:$0xff]
    %v417 = vld [vmem:[#allocation10 + $0x2f0] sm:$0xff]
    %v418 = vld [vmem:[#allocation10 + $0x2f8] sm:$0xff]
    %v419 = vld [vmem:[#allocation10 + $0x300] sm:$0xff]
    %v420 = vld [vmem:[#allocation10 + $0x308] sm:$0xff]
    %v421 = vld [vmem:[#allocation10 + $0x310] sm:$0xff]
    %v422 = vld [vmem:[#allocation10 + $0x318] sm:$0xff]
    %v423 = vld [vmem:[#allocation10 + $0x320] sm:$0xff]
    %v424 = vld [vmem:[#allocation10 + $0x328] sm:$0xff]
    %v425 = vld [vmem:[#allocation10 + $0x330] sm:$0xff]
    %v426 = vld [vmem:[#allocation10 + $0x338] sm:$0xff]
    %v427 = vld [vmem:[#allocation10 + $0x340] sm:$0xff]
    %v428 = vld [vmem:[#allocation10 + $0x348] sm:$0xff]
    %v429 = vld [vmem:[#allocation10 + $0x350] sm:$0xff]
    %v430 = vld [vmem:[#allocation10 + $0x358] sm:$0xff]
    %v431 = vld [vmem:[#allocation10 + $0x360] sm:$0xff]
    %v432 = vld [vmem:[#allocation10 + $0x368] sm:$0xff]
    %v433 = vld [vmem:[#allocation10 + $0x370] sm:$0xff]
    %v434 = vld [vmem:[#allocation10 + $0x378] sm:$0xff]
    %v435 = vld [vmem:[#allocation10 + $0x380] sm:$0xff]
    %v436 = vld [vmem:[#allocation10 + $0x388] sm:$0xff]
    %v437 = vld [vmem:[#allocation10 + $0x390] sm:$0xff]
    %v438 = vld [vmem:[#allocation10 + $0x398] sm:$0xff]
    %v439 = vld [vmem:[#allocation10 + $0x3a0] sm:$0xff]
    %v440 = vld [vmem:[#allocation10 + $0x3a8] sm:$0xff]
    %v441 = vld [vmem:[#allocation10 + $0x3b0] sm:$0xff]
    %v442 = vld [vmem:[#allocation10 + $0x3b8] sm:$0xff]
    %v443 = vld [vmem:[#allocation10 + $0x3c0] sm:$0xff]
    %v444 = vld [vmem:[#allocation10 + $0x3c8] sm:$0xff]
    %v445 = vld [vmem:[#allocation10 + $0x3d0] sm:$0xff]
    %v446 = vld [vmem:[#allocation10 + $0x3d8] sm:$0xff]
    %v447 = vld [vmem:[#allocation10 + $0x3e0] sm:$0xff]
    %v448 = vld [vmem:[#allocation10 + $0x3e8] sm:$0xff]
    %v449 = vld [vmem:[#allocation10 + $0x3f0] sm:$0xff]
    %v450 = vld [vmem:[#allocation10 + $0x3f8] sm:$0xff]
    %v451 = vld [vmem:[#allocation10 + $0x400] sm:$0xff]
    %v452 = vld [vmem:[#allocation10 + $0x408] sm:$0xff]
    %v453 = vld [vmem:[#allocation10 + $0x410] sm:$0xff]
    %v454 = vld [vmem:[#allocation10 + $0x418] sm:$0xff]
    %v455 = vld [vmem:[#allocation10 + $0x420] sm:$0xff]
    %v456 = vld [vmem:[#allocation10 + $0x428] sm:$0xff]
    %v457 = vld [vmem:[#allocation10 + $0x430] sm:$0xff]
    %v458 = vld [vmem:[#allocation10 + $0x438] sm:$0xff]
    %v459 = vld [vmem:[#allocation10 + $0x440] sm:$0xff]
    %v460 = vld [vmem:[#allocation10 + $0x448] sm:$0xff]
    %v461 = vld [vmem:[#allocation10 + $0x450] sm:$0xff]
    %v462 = vld [vmem:[#allocation10 + $0x458] sm:$0xff]
    %v463 = vld [vmem:[#allocation10 + $0x460] sm:$0xff]
    %v464 = vld [vmem:[#allocation10 + $0x468] sm:$0xff]
    %v465 = vld [vmem:[#allocation10 + $0x470] sm:$0xff]
    %v466 = vld [vmem:[#allocation10 + $0x478] sm:$0xff]
    %v467 = vld [vmem:[#allocation10 + $0x480] sm:$0xff]
    %v468 = vld [vmem:[#allocation10 + $0x488] sm:$0xff]
    %v469 = vld [vmem:[#allocation10 + $0x490] sm:$0xff]
    %v470 = vld [vmem:[#allocation10 + $0x498] sm:$0xff]
    %v471 = vld [vmem:[#allocation10 + $0x4a0] sm:$0xff]
    %v472 = vld [vmem:[#allocation10 + $0x4a8] sm:$0xff]
    %v473 = vld [vmem:[#allocation10 + $0x4b0] sm:$0xff]
    %v474 = vld [vmem:[#allocation10 + $0x4b8] sm:$0xff]
    %v475 = vld [vmem:[#allocation10 + $0x4c0] sm:$0xff]
    %v476 = vld [vmem:[#allocation10 + $0x4c8] sm:$0xff]
    %v477 = vld [vmem:[#allocation10 + $0x4d0] sm:$0xff]
    %v478 = vld [vmem:[#allocation10 + $0x4d8] sm:$0xff]
    %v479 = vld [vmem:[#allocation10 + $0x4e0] sm:$0xff]
    %v480 = vld [vmem:[#allocation10 + $0x4e8] sm:$0xff]
    %v481 = vld [vmem:[#allocation10 + $0x4f0] sm:$0xff]
    %v482 = vld [vmem:[#allocation10 + $0x4f8] sm:$0xff]
    %v483 = vld [vmem:[#allocation10 + $0x500] sm:$0xff]
    %v484 = vld [vmem:[#allocation10 + $0x508] sm:$0xff]
    %v485 = vld [vmem:[#allocation10 + $0x510] sm:$0xff]
    %v486 = vld [vmem:[#allocation10 + $0x518] sm:$0xff]
    %v487 = vld [vmem:[#allocation10 + $0x520] sm:$0xff]
    %v488 = vld [vmem:[#allocation10 + $0x528] sm:$0xff]
    %v489 = vld [vmem:[#allocation10 + $0x530] sm:$0xff]
    %v490 = vld [vmem:[#allocation10 + $0x538] sm:$0xff]
    %v491 = vld [vmem:[#allocation10 + $0x540] sm:$0xff]
    %v492 = vld [vmem:[#allocation10 + $0x548] sm:$0xff]
    %v493 = vld [vmem:[#allocation10 + $0x550] sm:$0xff]
    %v494 = vld [vmem:[#allocation10 + $0x558] sm:$0xff]
    %v495 = vld [vmem:[#allocation10 + $0x560] sm:$0xff]
    %v496 = vld [vmem:[#allocation10 + $0x568] sm:$0xff]
    %v497 = vld [vmem:[#allocation10 + $0x570] sm:$0xff]
    %v498 = vld [vmem:[#allocation10 + $0x578] sm:$0xff]
    %v499 = vld [vmem:[#allocation10 + $0x580] sm:$0xff]
    %v500 = vld [vmem:[#allocation10 + $0x588] sm:$0xff]
    %v501 = vld [vmem:[#allocation10 + $0x590] sm:$0xff]
    %v502 = vld [vmem:[#allocation10 + $0x598] sm:$0xff]
    %v503 = vld [vmem:[#allocation10 + $0x5a0] sm:$0xff]
    %v504 = vld [vmem:[#allocation10 + $0x5a8] sm:$0xff]
    %v505 = vld [vmem:[#allocation10 + $0x5b0] sm:$0xff]
    %v506 = vld [vmem:[#allocation10 + $0x5b8] sm:$0xff]
    %v507 = vld [vmem:[#allocation10 + $0x5c0] sm:$0xff]
    %v508 = vld [vmem:[#allocation10 + $0x5c8] sm:$0xff]
    %v509 = vld [vmem:[#allocation10 + $0x5d0] sm:$0xff]
    %v510 = vld [vmem:[#allocation10 + $0x5d8] sm:$0xff]
    %v511 = vld [vmem:[#allocation10 + $0x5e0] sm:$0xff]
    %v512 = vld [vmem:[#allocation10 + $0x5e8] sm:$0xff]
    %v513 = vld [vmem:[#allocation10 + $0x5f0] sm:$0xff]
    %v514 = vld [vmem:[#allocation10 + $0x5f8] sm:$0xff]
    %v515 = vld [vmem:[%s6] sm:$0x7]
    %v517 = vperm.slane %v515, 0
    %v518 = vperm.slane %v515, 1
    %v519 = vperm.slane %v515, 2
    %523 = vmatpush.msra.mxu0 %v368
    %524 = vmatpush.msra.mxu0 %v365
    %525 = vmatpush.msra.mxu0 %v362
    %526 = vmatpush.msra.mxu0 %v359
    %527 = vmatpush.msra.mxu0 %v356
    %528 = vmatpush.msra.mxu0 %v353
    %529 = vmatpush.msra.mxu0 %v350
    %530 = vmatpush.msra.mxu0 %v347
    %531 = vmatpush.msra.mxu0 %v344
    %532 = vmatpush.msra.mxu0 %v341
    %533 = vmatpush.msra.mxu0 %v338
    %534 = vmatpush.msra.mxu0 %v335
    %535 = vmatpush.msra.mxu0 %v332
    %536 = vmatpush.msra.mxu0 %v329
    %537 = vmatpush.msra.mxu0 %v326
    %538 = vmatpush.msra.mxu0 %v323
    %539 = vmatmul.f32.gmra.mxu0 %v319
    %v540 = vpop.f32.mrf.mxu0
    %v541 = vadd.f32 %v517, %v540
    %542 = vdwg.mxu0
    %543 = vmatpush.msra.mxu0 %v416
    %544 = vmatpush.msra.mxu0 %v413
    %545 = vmatpush.msra.mxu0 %v410
    %546 = vmatpush.msra.mxu0 %v407
    %547 = vmatpush.msra.mxu0 %v404
    %548 = vmatpush.msra.mxu0 %v401
    %549 = vmatpush.msra.mxu0 %v398
    %550 = vmatpush.msra.mxu0 %v395
    %551 = vmatpush.msra.mxu0 %v392
    %552 = vmatpush.msra.mxu0 %v389
    %553 = vmatpush.msra.mxu0 %v386
    %554 = vmatpush.msra.mxu0 %v383
    %555 = vmatpush.msra.mxu0 %v380
    %556 = vmatpush.msra.mxu0 %v377
    %557 = vmatpush.msra.mxu0 %v374
    %558 = vmatpush.msra.mxu0 %v371
    %559 = vmatmul.f32.gmra.mxu0 %v320
    %v560 = vpop.f32.mrf.mxu0
    %v561 = vadd.f32 %v541, %v560
    %562 = vdwg.mxu0
    %563 = vmatpush.msra.mxu0 %v464
    %564 = vmatpush.msra.mxu0 %v461
    %565 = vmatpush.msra.mxu0 %v458
    %566 = vmatpush.msra.mxu0 %v455
    %567 = vmatpush.msra.mxu0 %v452
    %568 = vmatpush.msra.mxu0 %v449
    %569 = vmatpush.msra.mxu0 %v446
    %570 = vmatpush.msra.mxu0 %v443
    %571 = vmatpush.msra.mxu0 %v440
    %572 = vmatpush.msra.mxu0 %v437
    %573 = vmatpush.msra.mxu0 %v434
    %574 = vmatpush.msra.mxu0 %v431
    %575 = vmatpush.msra.mxu0 %v428
    %576 = vmatpush.msra.mxu0 %v425
    %577 = vmatpush.msra.mxu0 %v422
    %578 = vmatpush.msra.mxu0 %v419
    %579 = vmatmul.f32.gmra.mxu0 %v321
    %v580 = vpop.f32.mrf.mxu0
    %v581 = vadd.f32 %v561, %v580
    %582 = vdwg.mxu0
    %583 = vmatpush.msra.mxu0 %v512
    %584 = vmatpush.msra.mxu0 %v509
    %585 = vmatpush.msra.mxu0 %v506
    %586 = vmatpush.msra.mxu0 %v503
    %587 = vmatpush.msra.mxu0 %v500
    %588 = vmatpush.msra.mxu0 %v497
    %589 = vmatpush.msra.mxu0 %v494
    %590 = vmatpush.msra.mxu0 %v491
    %591 = vmatpush.msra.mxu0 %v488
    %592 = vmatpush.msra.mxu0 %v485
    %593 = vmatpush.msra.mxu0 %v482
    %594 = vmatpush.msra.mxu0 %v479
    %595 = vmatpush.msra.mxu0 %v476
    %596 = vmatpush.msra.mxu0 %v473
    %597 = vmatpush.msra.mxu0 %v470
    %598 = vmatpush.msra.mxu0 %v467
    %599 = vmatmul.f32.gmra.mxu0 %v322
    %v600 = vpop.f32.mrf.mxu0
    %v601 = vadd.f32 %v581, %v600
    %602 = vdwg.mxu0
    %603 = vmatpush.msra.mxu0 %v369
    %604 = vmatpush.msra.mxu0 %v366
    %605 = vmatpush.msra.mxu0 %v363
    %606 = vmatpush.msra.mxu0 %v360
    %607 = vmatpush.msra.mxu0 %v357
    %608 = vmatpush.msra.mxu0 %v354
    %609 = vmatpush.msra.mxu0 %v351
    %610 = vmatpush.msra.mxu0 %v348
    %611 = vmatpush.msra.mxu0 %v345
    %612 = vmatpush.msra.mxu0 %v342
    %613 = vmatpush.msra.mxu0 %v339
    %614 = vmatpush.msra.mxu0 %v336
    %615 = vmatpush.msra.mxu0 %v333
    %616 = vmatpush.msra.mxu0 %v330
    %617 = vmatpush.msra.mxu0 %v327
    %618 = vmatpush.msra.mxu0 %v324
    %619 = vmatmul.f32.gmra.mxu0 %v319
    %v620 = vpop.f32.mrf.mxu0
    %v621 = vadd.f32 %v518, %v620
    %622 = vdwg.mxu0
    %623 = vmatpush.msra.mxu0 %v417
    %624 = vmatpush.msra.mxu0 %v414
    %625 = vmatpush.msra.mxu0 %v411
    %626 = vmatpush.msra.mxu0 %v408
    %627 = vmatpush.msra.mxu0 %v405
    %628 = vmatpush.msra.mxu0 %v402
    %629 = vmatpush.msra.mxu0 %v399
    %630 = vmatpush.msra.mxu0 %v396
    %631 = vmatpush.msra.mxu0 %v393
    %632 = vmatpush.msra.mxu0 %v390
    %633 = vmatpush.msra.mxu0 %v387
    %634 = vmatpush.msra.mxu0 %v384
    %635 = vmatpush.msra.mxu0 %v381
    %636 = vmatpush.msra.mxu0 %v378
    %637 = vmatpush.msra.mxu0 %v375
    %638 = vmatpush.msra.mxu0 %v372
    %639 = vmatmul.f32.gmra.mxu0 %v320
    %v640 = vpop.f32.mrf.mxu0
    %v641 = vadd.f32 %v621, %v640
    %642 = vdwg.mxu0
    %643 = vmatpush.msra.mxu0 %v465
    %644 = vmatpush.msra.mxu0 %v462
    %645 = vmatpush.msra.mxu0 %v459
    %646 = vmatpush.msra.mxu0 %v456
    %647 = vmatpush.msra.mxu0 %v453
    %648 = vmatpush.msra.mxu0 %v450
    %649 = vmatpush.msra.mxu0 %v447
    %650 = vmatpush.msra.mxu0 %v444
    %651 = vmatpush.msra.mxu0 %v441
    %652 = vmatpush.msra.mxu0 %v438
    %653 = vmatpush.msra.mxu0 %v435
    %654 = vmatpush.msra.mxu0 %v432
    %655 = vmatpush.msra.mxu0 %v429
    %656 = vmatpush.msra.mxu0 %v426
    %657 = vmatpush.msra.mxu0 %v423
    %658 = vmatpush.msra.mxu0 %v420
    %659 = vmatmul.f32.gmra.mxu0 %v321
    %v660 = vpop.f32.mrf.mxu0
    %v661 = vadd.f32 %v641, %v660
    %662 = vdwg.mxu0
    %663 = vmatpush.msra.mxu0 %v513
    %664 = vmatpush.msra.mxu0 %v510
    %665 = vmatpush.msra.mxu0 %v507
    %666 = vmatpush.msra.mxu0 %v504
    %667 = vmatpush.msra.mxu0 %v501
    %668 = vmatpush.msra.mxu0 %v498
    %669 = vmatpush.msra.mxu0 %v495
    %670 = vmatpush.msra.mxu0 %v492
    %671 = vmatpush.msra.mxu0 %v489
    %672 = vmatpush.msra.mxu0 %v486
    %673 = vmatpush.msra.mxu0 %v483
    %674 = vmatpush.msra.mxu0 %v480
    %675 = vmatpush.msra.mxu0 %v477
    %676 = vmatpush.msra.mxu0 %v474
    %677 = vmatpush.msra.mxu0 %v471
    %678 = vmatpush.msra.mxu0 %v468
    %679 = vmatmul.f32.gmra.mxu0 %v322
    %v680 = vpop.f32.mrf.mxu0
    %v681 = vadd.f32 %v661, %v680
    %682 = vdwg.mxu0
    %683 = vmatpush.msra.mxu0 %v370
    %684 = vmatpush.msra.mxu0 %v367
    %685 = vmatpush.msra.mxu0 %v364
    %686 = vmatpush.msra.mxu0 %v361
    %687 = vmatpush.msra.mxu0 %v358
    %688 = vmatpush.msra.mxu0 %v355
    %689 = vmatpush.msra.mxu0 %v352
    %690 = vmatpush.msra.mxu0 %v349
    %691 = vmatpush.msra.mxu0 %v346
    %692 = vmatpush.msra.mxu0 %v343
    %693 = vmatpush.msra.mxu0 %v340
    %694 = vmatpush.msra.mxu0 %v337
    %695 = vmatpush.msra.mxu0 %v334
    %696 = vmatpush.msra.mxu0 %v331
    %697 = vmatpush.msra.mxu0 %v328
    %698 = vmatpush.msra.mxu0 %v325
    %699 = vmatmul.f32.gmra.mxu0 %v319
    %v700 = vpop.f32.mrf.mxu0
    %v701 = vadd.f32 %v519, %v700
    %702 = vdwg.mxu0
    %703 = vmatpush.msra.mxu0 %v418
    %704 = vmatpush.msra.mxu0 %v415
    %705 = vmatpush.msra.mxu0 %v412
    %706 = vmatpush.msra.mxu0 %v409
    %707 = vmatpush.msra.mxu0 %v406
    %708 = vmatpush.msra.mxu0 %v403
    %709 = vmatpush.msra.mxu0 %v400
    %710 = vmatpush.msra.mxu0 %v397
    %711 = vmatpush.msra.mxu0 %v394
    %712 = vmatpush.msra.mxu0 %v391
    %713 = vmatpush.msra.mxu0 %v388
    %714 = vmatpush.msra.mxu0 %v385
    %715 = vmatpush.msra.mxu0 %v382
    %716 = vmatpush.msra.mxu0 %v379
    %717 = vmatpush.msra.mxu0 %v376
    %718 = vmatpush.msra.mxu0 %v373
    %719 = vmatmul.f32.gmra.mxu0 %v320
    %v720 = vpop.f32.mrf.mxu0
    %v721 = vadd.f32 %v701, %v720
    %722 = vdwg.mxu0
    %723 = vmatpush.msra.mxu0 %v466
    %724 = vmatpush.msra.mxu0 %v463
    %725 = vmatpush.msra.mxu0 %v460
    %726 = vmatpush.msra.mxu0 %v457
    %727 = vmatpush.msra.mxu0 %v454
    %728 = vmatpush.msra.mxu0 %v451
    %729 = vmatpush.msra.mxu0 %v448
    %730 = vmatpush.msra.mxu0 %v445
    %731 = vmatpush.msra.mxu0 %v442
    %732 = vmatpush.msra.mxu0 %v439
    %733 = vmatpush.msra.mxu0 %v436
    %734 = vmatpush.msra.mxu0 %v433
    %735 = vmatpush.msra.mxu0 %v430
    %736 = vmatpush.msra.mxu0 %v427
    %737 = vmatpush.msra.mxu0 %v424
    %738 = vmatpush.msra.mxu0 %v421
    %739 = vmatmul.f32.gmra.mxu0 %v321
    %v740 = vpop.f32.mrf.mxu0
    %v741 = vadd.f32 %v721, %v740
    %742 = vdwg.mxu0
    %743 = vmatpush.msra.mxu0 %v514
    %744 = vmatpush.msra.mxu0 %v511
    %745 = vmatpush.msra.mxu0 %v508
    %746 = vmatpush.msra.mxu0 %v505
    %747 = vmatpush.msra.mxu0 %v502
    %748 = vmatpush.msra.mxu0 %v499
    %749 = vmatpush.msra.mxu0 %v496
    %750 = vmatpush.msra.mxu0 %v493
    %751 = vmatpush.msra.mxu0 %v490
    %752 = vmatpush.msra.mxu0 %v487
    %753 = vmatpush.msra.mxu0 %v484
    %754 = vmatpush.msra.mxu0 %v481
    %755 = vmatpush.msra.mxu0 %v478
    %756 = vmatpush.msra.mxu0 %v475
    %757 = vmatpush.msra.mxu0 %v472
    %758 = vmatpush.msra.mxu0 %v469
    %759 = vmatmul.f32.gmra.mxu0 %v322
    %v760 = vpop.f32.mrf.mxu0
    %v761 = vadd.f32 %v741, %v760
    %762 = vdwg.mxu0
    %v763 = vmax.f32 %v601, 0.0
    %v764 = vmax.f32 %v681, 0.0
    %v765 = vmax.f32 %v761, 0.0
    %v766 = vld [vmem:[#allocation11] sm:$0x7]
    %v768 = vperm.slane %v766, 0
    %v769 = vperm.slane %v766, 1
    %v770 = vperm.slane %v766, 2
    %v774 = vmul.f32 %v763, %v768
    %v775 = vmul.f32 %v764, %v769
    %v776 = vmul.f32 %v765, %v770
    %v777 = vadd.f32 %v774, %v775
    %v778 = vadd.f32 %v777, %v776
    %779 = vadd.xlane.f32.xlu0 %v778
    %v780 = vpop.xlane.xlu0 %779
    %s781 = sld [smem:[#allocation2]]
    %v782 = vstv %s781
    %v783 = vadd.f32 %v780, %v782
    %vm784 = vcmask 7168
    %785 = vst.msk [vmem:[%s9] sm:$0xff] %vm784, %v783
    // Predicated region
    $region62: #{tpu_custom_call.1} parent=1 // pred_check
      _
    $region63: #{tpu_custom_call.1} parent=1 // pred_check_branch
      %787 = sbr.rel (0) target = $region65
    $region64: #{tpu_custom_call.1} parent=1 // pred_region
      _
    $region65: #{tpu_custom_call.1} parent=1 // pred_fallthru
      _
    // Predicated region
    $region66: #{tpu_custom_call.1} parent=1 // pred_check
      _
    $region67: #{tpu_custom_call.1} parent=1 // pred_check_branch
      %789 = sbr.rel (0) target = $region69
    $region68: #{tpu_custom_call.1} parent=1 // pred_region
      _
    $region69: #{tpu_custom_call.1} parent=1 // pred_fallthru
      _
    %790 = vsyncpa [#allocation4], 1
    %791 = vsyncpa [#allocation6], 1
    %792 = vsyncpa [#allocation9], 1
    %793 = vsyncpa [#allocation12], 1

</llo_original>
